<compile_context>
chip_gen: v7x
topology: tpu7x:2x2x1
jax: 0.10.0
libtpu: 0.0.40
codegen_flags: <defaults>
</compile_context>

<pallas_src>
import jax
import jax.numpy as jnp
from jax.experimental import pallas as pl
from jax.experimental.pallas import tpu as pltpu

K_DEFAULT = 128
EDGE_TYPES_DEFAULT = 1024
_SQRT_2PI = (2.0 * 3.14159) ** 0.5  # matches the torch.jit.script gaussian()
_SQRT_HALF = 0.5 ** 0.5

# Row tile: 4096 rows x 128 lanes x 4 B = 2 MiB per output block; with
# double-buffering (~4 MiB out + tiny inputs) this fits comfortably inside
# the scoped VMEM limit on v5e/v6e (128 MiB) and v7x (64 MiB), while being
# large enough (>=512) to sit near the HBM roofline and amortize the
# ~0.35 us per-grid-step overhead.
TR_MAX = 4096


def _gaussian_kernel(val_ref, mean_ref, inv_std_s_ref, coef_ref, o_ref):
    # val_ref: [tR, 1]; mean_ref / inv_std_s_ref / coef_ref: [1, K]; o_ref: [tR, K]
    val = val_ref[...]                      # [tR, 1] f32 (= mul*x + bias)
    mean = mean_ref[...]                    # [1, K]  f32
    inv_std_s = inv_std_s_ref[...]          # [1, K]  f32 = sqrt(0.5)/std
    coef = coef_ref[...]                    # [1, K]  f32 = 1/(sqrt(2*pi)*std)

    t = (val - mean) * inv_std_s            # broadcast -> [tR, K]
    out = jnp.exp(-(t * t)) * coef          # == exp(-0.5*((v-m)/s)^2)/(a*s)
    o_ref[...] = out.astype(o_ref.dtype)


def gaussian_layer_forward(x, edge_type, params):
    """Pallas implementation of GaussianLayer.forward.

    x:         [B, N, N] float32
    edge_type: [B, N, N] int32
    returns    [B, N, N, K] float32 (dtype of params["means"])
    """
    means_w = params["means"]   # [1, K] float32
    stds_w = params["stds"]     # [1, K] float32
    mul_w = params["mul"]       # [edge_types, 1] float32
    bias_w = params["bias"]     # [edge_types, 1] float32

    K = means_w.shape[-1]
    B, N, _ = x.shape
    R = B * N * N

    # Glue: embedding gathers (scalar per edge) fused with the affine so the
    # kernel streams a single [R, 1] input instead of three.
    mul = mul_w[edge_type].reshape(B, N, N).astype(x.dtype)
    bias = bias_w[edge_type].reshape(B, N, N).astype(x.dtype)
    val = (mul * x + bias).astype(jnp.float32).reshape(R, 1)

    # Basis preprocessing: hoist all per-std arithmetic out of the kernel.
    mean = means_w.astype(jnp.float32).reshape(1, K)
    std = jnp.abs(stds_w.astype(jnp.float32)).reshape(1, K) + 1e-5
    inv_std_scaled = jnp.float32(_SQRT_HALF) / std         # sqrt(0.5)/std
    coef = jnp.float32(1.0) / (jnp.float32(_SQRT_2PI) * std)

    # Tile selection: fixed large tile with a cdiv grid (Pallas masks the
    # partial last block).  For tiny problems fall back to a single block
    # equal to the full row extent (always legal: block == full array dim).
    tR = TR_MAX if R >= TR_MAX else R
    grid = (pl.cdiv(R, tR),)

    row_spec = pl.BlockSpec((tR, 1), lambda i: (i, 0))
    basis_spec = pl.BlockSpec((1, K), lambda i: (0, 0))

    out = pl.pallas_call(
        _gaussian_kernel,
        out_shape=jax.ShapeDtypeStruct((R, K), means_w.dtype),
        grid_spec=pltpu.PrefetchScalarGridSpec(
            num_scalar_prefetch=0,
            grid=grid,
            in_specs=[row_spec, basis_spec, basis_spec, basis_spec],
            out_specs=pl.BlockSpec((tR, K), lambda i: (i, 0)),
        ),
        compiler_params=pltpu.CompilerParams(
            dimension_semantics=("parallel",),
        ),
    )(val, mean, inv_std_scaled, coef)

    return out.reshape(B, N, N, K)


def init_params(key, K=K_DEFAULT, edge_types=EDGE_TYPES_DEFAULT):
    k_means, k_stds = jax.random.split(key)
    return {
        # nn.init.uniform_(means.weight, 0, 3)
        "means": jax.random.uniform(k_means, (1, K), jnp.float32, 0.0, 3.0),
        # nn.init.uniform_(stds.weight, 0, 3)
        "stds": jax.random.uniform(k_stds, (1, K), jnp.float32, 0.0, 3.0),
        # nn.init.constant_(mul.weight, 1)
        "mul": jnp.ones((edge_types, 1), jnp.float32),
        # nn.init.constant_(bias.weight, 0)
        "bias": jnp.zeros((edge_types, 1), jnp.float32),
    }


def _reference(x, edge_type, params):
    """Pure-JAX reference mirroring the PyTorch forward."""
    K = params["means"].shape[-1]
    mul = params["mul"][edge_type].astype(x.dtype)
    bias = params["bias"][edge_type].astype(x.dtype)
    xv = mul * x[..., None] + bias
    xv = jnp.broadcast_to(xv, xv.shape[:-1] + (K,)).astype(jnp.float32)
    mean = params["means"].astype(jnp.float32).reshape(-1)
    std = jnp.abs(params["stds"].astype(jnp.float32)).reshape(-1) + 1e-5
    a = (2 * 3.14159) ** 0.5
    return (jnp.exp(-0.5 * ((xv - mean) / std) ** 2) / (a * std)).astype(
        params["means"].dtype
    )


if __name__ == "__main__":
    key = jax.random.PRNGKey(0)
    k_params, k_x, k_e = jax.random.split(key, 3)

    B, N, K, edge_types = 2, 8, K_DEFAULT, EDGE_TYPES_DEFAULT
    params = init_params(k_params, K=K, edge_types=edge_types)

    x = jax.random.uniform(k_x, (B, N, N), jnp.float32, 0.0, 5.0)
    edge_type = jax.random.randint(k_e, (B, N, N), 0, edge_types, jnp.int32)

    out = gaussian_layer_forward(x, edge_type, params)
    out = jax.block_until_ready(out)

    ref = _reference(x, edge_type, params)
    assert out.shape == (B, N, N, K)
    assert jnp.allclose(out, ref, atol=1e-5, rtol=1e-5)

    print("KERNEL_OK")
</pallas_src>

<mosaic_0001>
module attributes {stable_mosaic.version = 11 : i64} {
  func.func @_gaussian_kernel(%arg0: i32, %arg1: memref<128x1xf32, #tpu.memory_space<vmem>>, %arg2: memref<1x128xf32, #tpu.memory_space<vmem>>, %arg3: memref<1x128xf32, #tpu.memory_space<vmem>>, %arg4: memref<1x128xf32, #tpu.memory_space<vmem>>, %arg5: memref<128x128xf32, #tpu.memory_space<vmem>>) attributes {dimension_semantics = [#tpu.dimension_semantics<parallel>], iteration_bounds = array<i64: 1>, scalar_prefetch = 0 : i64, scratch_operands = 0 : i64, tpu.core_type = #tpu.core_type<tc>, window_params = [{transform_indices = @transform_0, window_bounds = array<i64: 128, 1>}, {pipeline_mode = #tpu.pipeline_mode<synchronous>, transform_indices = @transform_1, window_bounds = array<i64: 1, 128>}, {pipeline_mode = #tpu.pipeline_mode<synchronous>, transform_indices = @transform_2, window_bounds = array<i64: 1, 128>}, {pipeline_mode = #tpu.pipeline_mode<synchronous>, transform_indices = @transform_3, window_bounds = array<i64: 1, 128>}, {transform_indices = @transform_4, window_bounds = array<i64: 128, 128>}]} {
    %c0 = arith.constant 0 : index
    %c0_0 = arith.constant 0 : index
    %0 = vector.load %arg1[%c0, %c0_0] : memref<128x1xf32, #tpu.memory_space<vmem>>, vector<128x1xf32>
    %c0_1 = arith.constant 0 : index
    %c0_2 = arith.constant 0 : index
    %1 = vector.load %arg2[%c0_1, %c0_2] : memref<1x128xf32, #tpu.memory_space<vmem>>, vector<1x128xf32>
    %c0_3 = arith.constant 0 : index
    %c0_4 = arith.constant 0 : index
    %2 = vector.load %arg3[%c0_3, %c0_4] : memref<1x128xf32, #tpu.memory_space<vmem>>, vector<1x128xf32>
    %c0_5 = arith.constant 0 : index
    %c0_6 = arith.constant 0 : index
    %3 = vector.load %arg4[%c0_5, %c0_6] : memref<1x128xf32, #tpu.memory_space<vmem>>, vector<1x128xf32>
    %4 = vector.broadcast %0 : vector<128x1xf32> to vector<128x128xf32>
    %5 = vector.broadcast %1 : vector<1x128xf32> to vector<128x128xf32>
    %6 = arith.subf %4, %5 : vector<128x128xf32>
    %7 = vector.broadcast %2 : vector<1x128xf32> to vector<128x128xf32>
    %8 = arith.mulf %6, %7 : vector<128x128xf32>
    %9 = arith.mulf %8, %8 : vector<128x128xf32>
    %cst = arith.constant 0.000000e+00 : f32
    %10 = vector.broadcast %cst : f32 to vector<128x128xf32>
    %11 = arith.subf %10, %9 : vector<128x128xf32>
    %12 = math.exp %11 : vector<128x128xf32>
    %13 = vector.broadcast %3 : vector<1x128xf32> to vector<128x128xf32>
    %14 = arith.mulf %12, %13 : vector<128x128xf32>
    %c0_7 = arith.constant 0 : index
    %c0_8 = arith.constant 0 : index
    %15 = vector.load %arg5[%c0_7, %c0_8] : memref<128x128xf32, #tpu.memory_space<vmem>>, vector<128x128xf32>
    tpu.vector_store %arg5[%c0_7, %c0_8], %14 {strides = array<i32>} : memref<128x128xf32, #tpu.memory_space<vmem>>, vector<128x128xf32>,
    return
  }
  func.func @transform_0(%arg0: i32) -> (i32, i32) {
    %c0_i32 = arith.constant 0 : i32
    %c0_i32_0 = arith.constant 0 : i32
    return %arg0, %c0_i32 : i32, i32
  }
  func.func @transform_1(%arg0: i32) -> (i32, i32) {
    %c0_i32 = arith.constant 0 : i32
    %c0_i32_0 = arith.constant 0 : i32
    %c0_i32_1 = arith.constant 0 : i32
    return %c0_i32, %c0_i32_0 : i32, i32
  }
  func.func @transform_2(%arg0: i32) -> (i32, i32) {
    %c0_i32 = arith.constant 0 : i32
    %c0_i32_0 = arith.constant 0 : i32
    %c0_i32_1 = arith.constant 0 : i32
    return %c0_i32, %c0_i32_0 : i32, i32
  }
  func.func @transform_3(%arg0: i32) -> (i32, i32) {
    %c0_i32 = arith.constant 0 : i32
    %c0_i32_0 = arith.constant 0 : i32
    %c0_i32_1 = arith.constant 0 : i32
    return %c0_i32, %c0_i32_0 : i32, i32
  }
  func.func @transform_4(%arg0: i32) -> (i32, i32) {
    %c0_i32 = arith.constant 0 : i32
    %c0_i32_0 = arith.constant 0 : i32
    return %arg0, %c0_i32 : i32, i32
  }
}

</mosaic_0001>

<llo_original>
// kernel: tpu_custom_call.1
$region0: #{tpu_custom_call.1}
  #allocation0 [shape = 'u32[]', space=smem, size = 0x4, offset = 0x4, fixed_abs, tag = 'smem constant byte address 0x4 - core index']
  #allocation1 [shape = 'u32[144,128]{1,0:T(1,128)}', space=vmem, size = 0x12000, scoped, tag = 'internal scratch']
  %s0 = inlined_call_operand.vmem [shape: f32[128,1], index: 0, kind: input, shape index: {}]
  %s1 = inlined_call_operand.vmem [shape: f32[1,128], index: 1, kind: input, shape index: {}]
  %s2 = inlined_call_operand.vmem [shape: f32[1,128], index: 2, kind: input, shape index: {}]
  %s3 = inlined_call_operand.vmem [shape: f32[1,128], index: 3, kind: input, shape index: {}]
  %s4 = inlined_call_operand.hbm [shape: f32[128,128], index: 4, kind: output, shape index: {}]
  %s5 = sld [smem:[#allocation0]]
  $region26: #{tpu_custom_call.1} parent=0
    _
  %s7 = ssub.s32 1, %s5
  %s8 = scalar_select 0, %s7, %s5
  $region1: #{tpu_custom_call.1} parent=0
    #allocation2 [shape = 'u8[65536]{0}', space=vmem, size = 0x10000, scoped, tag = 'output window, operand 0, single buffered']
    #allocation3 [shape = 's32[1]{0}', space=sflag, size = 0x4, scoped, tag = 'scoped memory for tpu_custom_call.1']
    %9 = vsyncpa [#allocation3], 0
    // Predicated region
    $region2: #{tpu_custom_call.1} parent=1 // pred_check
      _
    $region3: #{tpu_custom_call.1} parent=1 // pred_check_branch
      %11 = sbr.rel (0) target = $region5
    $region4: #{tpu_custom_call.1} parent=1 // pred_region
      _
    $region5: #{tpu_custom_call.1} parent=1 // pred_fallthru
      _
    // Predicated region
    $region6: #{tpu_custom_call.1} parent=1 // pred_check
      _
    $region7: #{tpu_custom_call.1} parent=1 // pred_check_branch
      %13 = sbr.rel (0) target = $region9
    $region8: #{tpu_custom_call.1} parent=1 // pred_region
      _
    $region9: #{tpu_custom_call.1} parent=1 // pred_fallthru
      _
    // Predicated region
    $region10: #{tpu_custom_call.1} parent=1 // pred_check
      _
    $region11: #{tpu_custom_call.1} parent=1 // pred_check_branch
      %15 = sbr.rel (0) target = $region13
    $region12: #{tpu_custom_call.1} parent=1 // pred_region
      _
    $region13: #{tpu_custom_call.1} parent=1 // pred_fallthru
      _
    // Predicated region
    $region14: #{tpu_custom_call.1} parent=1 // pred_check
      _
    $region15: #{tpu_custom_call.1} parent=1 // pred_check_branch
      %17 = sbr.rel (0) target = $region17
    $region16: #{tpu_custom_call.1} parent=1 // pred_region
      _
    $region17: #{tpu_custom_call.1} parent=1 // pred_fallthru
      _
    %v18 = vld [vmem:[%s0] sm:$0xff]
    %v19 = vld [vmem:[%s0 + $0x8] sm:$0xff]
    %v20 = vld [vmem:[%s0 + $0x10] sm:$0xff]
    %v21 = vld [vmem:[%s0 + $0x18] sm:$0xff]
    %v22 = vld [vmem:[%s0 + $0x20] sm:$0xff]
    %v23 = vld [vmem:[%s0 + $0x28] sm:$0xff]
    %v24 = vld [vmem:[%s0 + $0x30] sm:$0xff]
    %v25 = vld [vmem:[%s0 + $0x38] sm:$0xff]
    %v26 = vld [vmem:[%s0 + $0x40] sm:$0xff]
    %v27 = vld [vmem:[%s0 + $0x48] sm:$0xff]
    %v28 = vld [vmem:[%s0 + $0x50] sm:$0xff]
    %v29 = vld [vmem:[%s0 + $0x58] sm:$0xff]
    %v30 = vld [vmem:[%s0 + $0x60] sm:$0xff]
    %v31 = vld [vmem:[%s0 + $0x68] sm:$0xff]
    %v32 = vld [vmem:[%s0 + $0x70] sm:$0xff]
    %v33 = vld [vmem:[%s0 + $0x78] sm:$0xff]
    %v34 = vld [vmem:[%s1] sm:$0x1]
    %v35 = vld [vmem:[%s2] sm:$0x1]
    %v36 = vld [vmem:[%s3] sm:$0x1]
    %38 = vset.pattern.permute.xlu0 0
    %39 = vperm.xlu0 %38, %v18
    %v40 = vpop.permute.xlu0 %39
    %43 = vset.pattern.permute.xlu0 0
    %44 = vperm.xlu0 %43, %v19
    %v45 = vpop.permute.xlu0 %44
    %48 = vset.pattern.permute.xlu0 0
    %49 = vperm.xlu0 %48, %v20
    %v50 = vpop.permute.xlu0 %49
    %53 = vset.pattern.permute.xlu0 0
    %54 = vperm.xlu0 %53, %v21
    %v55 = vpop.permute.xlu0 %54
    %58 = vset.pattern.permute.xlu0 0
    %59 = vperm.xlu0 %58, %v22
    %v60 = vpop.permute.xlu0 %59
    %63 = vset.pattern.permute.xlu0 0
    %64 = vperm.xlu0 %63, %v23
    %v65 = vpop.permute.xlu0 %64
    %68 = vset.pattern.permute.xlu0 0
    %69 = vperm.xlu0 %68, %v24
    %v70 = vpop.permute.xlu0 %69
    %73 = vset.pattern.permute.xlu0 0
    %74 = vperm.xlu0 %73, %v25
    %v75 = vpop.permute.xlu0 %74
    %78 = vset.pattern.permute.xlu0 0
    %79 = vperm.xlu0 %78, %v26
    %v80 = vpop.permute.xlu0 %79
    %83 = vset.pattern.permute.xlu0 0
    %84 = vperm.xlu0 %83, %v27
    %v85 = vpop.permute.xlu0 %84
    %88 = vset.pattern.permute.xlu0 0
    %89 = vperm.xlu0 %88, %v28
    %v90 = vpop.permute.xlu0 %89
    %93 = vset.pattern.permute.xlu0 0
    %94 = vperm.xlu0 %93, %v29
    %v95 = vpop.permute.xlu0 %94
    %98 = vset.pattern.permute.xlu0 0
    %99 = vperm.xlu0 %98, %v30
    %v100 = vpop.permute.xlu0 %99
    %103 = vset.pattern.permute.xlu0 0
    %104 = vperm.xlu0 %103, %v31
    %v105 = vpop.permute.xlu0 %104
    %108 = vset.pattern.permute.xlu0 0
    %109 = vperm.xlu0 %108, %v32
    %v110 = vpop.permute.xlu0 %109
    %113 = vset.pattern.permute.xlu0 0
    %114 = vperm.xlu0 %113, %v33
    %v115 = vpop.permute.xlu0 %114
    %v118 = vlaneseq
    %v119 = vshrl.u32 %v118, 7
    %v120 = vsub.s32 0, %v119
    %v121 = vrot.slane %v34, %v120
    %v123 = vsub.f32 %v40, %v121
    %v124 = vsub.f32 %v45, %v121
    %v125 = vsub.f32 %v50, %v121
    %v126 = vsub.f32 %v55, %v121
    %v127 = vsub.f32 %v60, %v121
    %v128 = vsub.f32 %v65, %v121
    %v129 = vsub.f32 %v70, %v121
    %v130 = vsub.f32 %v75, %v121
    %v131 = vsub.f32 %v80, %v121
    %v132 = vsub.f32 %v85, %v121
    %v133 = vsub.f32 %v90, %v121
    %v134 = vsub.f32 %v95, %v121
    %v135 = vsub.f32 %v100, %v121
    %v136 = vsub.f32 %v105, %v121
    %v137 = vsub.f32 %v110, %v121
    %v138 = vsub.f32 %v115, %v121
    %v140 = vlaneseq
    %v141 = vshrl.u32 %v140, 7
    %v142 = vsub.s32 0, %v141
    %v143 = vrot.slane %v35, %v142
    %v145 = vmul.f32 %v123, %v143
    %v146 = vmul.f32 %v124, %v143
    %v147 = vmul.f32 %v125, %v143
    %v148 = vmul.f32 %v126, %v143
    %v149 = vmul.f32 %v127, %v143
    %v150 = vmul.f32 %v128, %v143
    %v151 = vmul.f32 %v129, %v143
    %v152 = vmul.f32 %v130, %v143
    %v153 = vmul.f32 %v131, %v143
    %v154 = vmul.f32 %v132, %v143
    %v155 = vmul.f32 %v133, %v143
    %v156 = vmul.f32 %v134, %v143
    %v157 = vmul.f32 %v135, %v143
    %v158 = vmul.f32 %v136, %v143
    %v159 = vmul.f32 %v137, %v143
    %v160 = vmul.f32 %v138, %v143
    %v161 = vmul.f32 %v145, %v145
    %v162 = vmul.f32 %v146, %v146
    %v163 = vmul.f32 %v147, %v147
    %v164 = vmul.f32 %v148, %v148
    %v165 = vmul.f32 %v149, %v149
    %v166 = vmul.f32 %v150, %v150
    %v167 = vmul.f32 %v151, %v151
    %v168 = vmul.f32 %v152, %v152
    %v169 = vmul.f32 %v153, %v153
    %v170 = vmul.f32 %v154, %v154
    %v171 = vmul.f32 %v155, %v155
    %v172 = vmul.f32 %v156, %v156
    %v173 = vmul.f32 %v157, %v157
    %v174 = vmul.f32 %v158, %v158
    %v175 = vmul.f32 %v159, %v159
    %v176 = vmul.f32 %v160, %v160
    %v177 = vsub.f32 0.0, %v161
    %v178 = vsub.f32 0.0, %v162
    %v179 = vsub.f32 0.0, %v163
    %v180 = vsub.f32 0.0, %v164
    %v181 = vsub.f32 0.0, %v165
    %v182 = vsub.f32 0.0, %v166
    %v183 = vsub.f32 0.0, %v167
    %v184 = vsub.f32 0.0, %v168
    %v185 = vsub.f32 0.0, %v169
    %v186 = vsub.f32 0.0, %v170
    %v187 = vsub.f32 0.0, %v171
    %v188 = vsub.f32 0.0, %v172
    %v189 = vsub.f32 0.0, %v173
    %v190 = vsub.f32 0.0, %v174
    %v191 = vsub.f32 0.0, %v175
    %v192 = vsub.f32 0.0, %v176
    %v193 = vmul.f32 %v177, 1.442695
    %v194 = vpow.pop %v193
    %v195 = vmul.f32 %v178, 1.442695
    %v196 = vpow.pop %v195
    %v197 = vmul.f32 %v179, 1.442695
    %v198 = vpow.pop %v197
    %v199 = vmul.f32 %v180, 1.442695
    %v200 = vpow.pop %v199
    %v201 = vmul.f32 %v181, 1.442695
    %v202 = vpow.pop %v201
    %v203 = vmul.f32 %v182, 1.442695
    %v204 = vpow.pop %v203
    %v205 = vmul.f32 %v183, 1.442695
    %v206 = vpow.pop %v205
    %v207 = vmul.f32 %v184, 1.442695
    %v208 = vpow.pop %v207
    %v209 = vmul.f32 %v185, 1.442695
    %v210 = vpow.pop %v209
    %v211 = vmul.f32 %v186, 1.442695
    %v212 = vpow.pop %v211
    %v213 = vmul.f32 %v187, 1.442695
    %v214 = vpow.pop %v213
    %v215 = vmul.f32 %v188, 1.442695
    %v216 = vpow.pop %v215
    %v217 = vmul.f32 %v189, 1.442695
    %v218 = vpow.pop %v217
    %v219 = vmul.f32 %v190, 1.442695
    %v220 = vpow.pop %v219
    %v221 = vmul.f32 %v191, 1.442695
    %v222 = vpow.pop %v221
    %v223 = vmul.f32 %v192, 1.442695
    %v224 = vpow.pop %v223
    %v226 = vlaneseq
    %v227 = vshrl.u32 %v226, 7
    %v228 = vsub.s32 0, %v227
    %v229 = vrot.slane %v36, %v228
    %v231 = vmul.f32 %v194, %v229
    %v232 = vmul.f32 %v196, %v229
    %v233 = vmul.f32 %v198, %v229
    %v234 = vmul.f32 %v200, %v229
    %v235 = vmul.f32 %v202, %v229
    %v236 = vmul.f32 %v204, %v229
    %v237 = vmul.f32 %v206, %v229
    %v238 = vmul.f32 %v208, %v229
    %v239 = vmul.f32 %v210, %v229
    %v240 = vmul.f32 %v212, %v229
    %v241 = vmul.f32 %v214, %v229
    %v242 = vmul.f32 %v216, %v229
    %v243 = vmul.f32 %v218, %v229
    %v244 = vmul.f32 %v220, %v229
    %v245 = vmul.f32 %v222, %v229
    %v246 = vmul.f32 %v224, %v229
    %247 = vst [vmem:[#allocation2] sm:$0xff] %v231
    %248 = vst [vmem:[#allocation2 + $0x8] sm:$0xff] %v232
    %249 = vst [vmem:[#allocation2 + $0x10] sm:$0xff] %v233
    %250 = vst [vmem:[#allocation2 + $0x18] sm:$0xff] %v234
    %251 = vst [vmem:[#allocation2 + $0x20] sm:$0xff] %v235
    %252 = vst [vmem:[#allocation2 + $0x28] sm:$0xff] %v236
    %253 = vst [vmem:[#allocation2 + $0x30] sm:$0xff] %v237
    %254 = vst [vmem:[#allocation2 + $0x38] sm:$0xff] %v238
    %255 = vst [vmem:[#allocation2 + $0x40] sm:$0xff] %v239
    %256 = vst [vmem:[#allocation2 + $0x48] sm:$0xff] %v240
    %257 = vst [vmem:[#allocation2 + $0x50] sm:$0xff] %v241
    %258 = vst [vmem:[#allocation2 + $0x58] sm:$0xff] %v242
    %259 = vst [vmem:[#allocation2 + $0x60] sm:$0xff] %v243
    %260 = vst [vmem:[#allocation2 + $0x68] sm:$0xff] %v244
    %261 = vst [vmem:[#allocation2 + $0x70] sm:$0xff] %v245
    %262 = vst [vmem:[#allocation2 + $0x78] sm:$0xff] %v246
    // Predicated region
    $region18: #{tpu_custom_call.1} parent=1 // pred_check
      _
    $region19: #{tpu_custom_call.1} parent=1 // pred_check_branch
      %264 = sbr.rel (0) target = $region21
    $region20: #{tpu_custom_call.1} parent=1 // pred_region
      %s266 = ssub.s32 2048, 2048
      %267 = vsyncadd [#allocation3], %s266
      %s268 = sshll.u32 [#allocation2], 4
      %s269 = int_to_ptr.vmem [resolvable:$true] %s268
      %274 = dma.vmem_to_hbm [thread:$0]  %s269, 2048, %s4, [#allocation3], 128, 128, 8
    $region21: #{tpu_custom_call.1} parent=1 // pred_fallthru
      _
    // Predicated region
    $region22: #{tpu_custom_call.1} parent=1 // pred_check
      _
    $region23: #{tpu_custom_call.1} parent=1 // pred_check_branch
      %276 = sbr.rel (0) target = $region25
    $region24: #{tpu_custom_call.1} parent=1 // pred_region
      %277 = dma.done [#allocation3], 2048
    $region25: #{tpu_custom_call.1} parent=1 // pred_fallthru
      _
    %278 = vsyncpa [#allocation3], 1

</llo_original>
